<compile_context>
chip_gen: v6e
topology: v6e:2x2x1
jax: 0.10.0
libtpu: 0.0.40
codegen_flags: <defaults>
</compile_context>

<pallas_src>
import math
from functools import partial

import jax
import jax.numpy as jnp
from jax.experimental import pallas as pl
from jax.experimental.pallas import tpu as pltpu

DROP_P = 0.1
KEEP_SCALE = 1.0 / (1.0 - DROP_P)
# drop element iff top-24-bits(hash) < p * 2^24  (integer compare, exact to 2^-24)
_DROP_THRESHOLD_24 = int(round(DROP_P * (1 << 24)))

_MAX_TILE_ROWS = 4096  # 4096 x 128 f32 = 2 MiB / block


def _build_pe_table(embed_dim: int, max_len: int) -> jnp.ndarray:
    """Sine/cosine positional table, shape (max_len, embed_dim). Setup glue."""
    position = jnp.arange(0, max_len, dtype=jnp.float32)[:, None]            # (L, 1)
    div_term = jnp.exp(
        jnp.arange(0, embed_dim, 2, dtype=jnp.float32)
        * (-math.log(10000.0) / embed_dim)
    )                                                                        # (D/2,)
    pe = jnp.zeros((max_len, embed_dim), dtype=jnp.float32)
    pe = pe.at[:, 0::2].set(jnp.sin(position * div_term))
    pe = pe.at[:, 1::2].set(jnp.cos(position * div_term))
    return pe


def _pe_add_kernel(x_ref, pe_ref, o_ref):
    # Eval path: PE add only (dropout is a no-op in eval); no seed argument.
    o_ref[...] = (x_ref[...] + pe_ref[...]).astype(o_ref.dtype)


def _pe_dropout_kernel(seed_ref, x_ref, pe_ref, o_ref, *, rows_per_batch, tile_rows):
    # seed_ref: (1,) int32 scalar-prefetch (SMEM)
    # x_ref / o_ref: (TR, 128) blocks (batch dim squeezed); pe_ref: (TR, 128)
    t = pl.program_id(0)  # row-tile index (outer)
    b = pl.program_id(1)  # batch index   (inner)

    y = x_ref[...] + pe_ref[...]          # plain vreg-for-vreg VPU add
    tr, c = y.shape                       # c == 128 by construction

    # ---- counter-based dropout mask (murmur3 fmix32 finalizer) ----
    # Unique 32-bit counter per element of the whole (B, R, 128) tensor so
    # different batch rows / row-tiles never reuse the same bits.  The scalar
    # part of the offset rides the scalar unit; the counter uses a shift
    # (c == 128) instead of an integer vector multiply.
    rows = jax.lax.broadcasted_iota(jnp.int32, (tr, c), 0).astype(jnp.uint32)
    cols = jax.lax.broadcasted_iota(jnp.int32, (tr, c), 1).astype(jnp.uint32)
    row_off = (b * rows_per_batch + t * tile_rows).astype(jnp.uint32)
    ctr = ((rows + row_off) << 7) | cols

    h = ctr ^ (seed_ref[0].astype(jnp.uint32) * jnp.uint32(0x9E3779B9))
    h = (h ^ (h >> 16)) * jnp.uint32(0x85EBCA6B)
    h = (h ^ (h >> 13)) * jnp.uint32(0xC2B2AE35)
    h = h ^ (h >> 16)
    # keep with prob 1 - p: compare top 24 bits against p * 2^24 (int32-safe)
    keep = (h >> 8).astype(jnp.int32) >= _DROP_THRESHOLD_24

    o_ref[...] = jnp.where(keep, y * KEEP_SCALE, 0.0).astype(o_ref.dtype)


def _pick_tile_rows(R: int, B: int) -> int:
    """Largest row tile within the VMEM budget; prefers a divisor of R (no
    masked partial last tile) and keeps >= 2 grid steps along a parallel axis
    when B == 1 so both v7x TensorCores get work."""
    cap = _MAX_TILE_ROWS
    if B == 1 and R >= 16:
        cap = min(cap, max(8, (R // 2) // 8 * 8))
    if R <= cap:
        return R
    t = (cap // 8) * 8
    while t >= 8:
        if R % t == 0:
            return t
        t -= 8
    return (cap // 8) * 8


def positional_encoding_forward(x: jnp.ndarray,
                                pe_table: jnp.ndarray,
                                seed: int = 0,
                                training: bool = True) -> jnp.ndarray:
    """x: (B, S, D); pe_table: (max_len, D).  Returns dropout(x + pe[:S], p=0.1).

    Dropout uses a deterministic counter-hash Bernoulli(keep = 0.9) stream
    (keep probability quantized to 2^-24); it is NOT bit-compatible with the
    torch RNG stream.  With training=False the dropout is skipped entirely.
    """
    B, S, D = x.shape
    pe = pe_table[:S, :].astype(x.dtype)

    # Lane-dense view: fold (S, D) into rows of 128 lanes.  If S*D is not a
    # multiple of 128, pad D up to one (padding is sliced off at the end).
    if (S * D) % 128 == 0:
        Dp = D
        x_in, pe_in = x, pe
    else:
        Dp = -(-D // 128) * 128
        x_in = jnp.pad(x, ((0, 0), (0, 0), (0, Dp - D)))
        pe_in = jnp.pad(pe, ((0, 0), (0, Dp - D)))
    R, C = (S * Dp) // 128, 128
    x2 = x_in.reshape(B, R, C)
    pe2 = pe_in.reshape(R, C)

    tile_rows = _pick_tile_rows(R, B)
    n_tiles = pl.cdiv(R, tile_rows)

    cparams = pltpu.CompilerParams(
        # Fully parallel grid -> shards across v7x's 2 TCs; neutral elsewhere.
        dimension_semantics=("parallel", "parallel"),
    )
    out_shape = jax.ShapeDtypeStruct((B, R, C), x.dtype)

    if training:
        seed_arr = jnp.array([seed], dtype=jnp.int32)
        kernel = partial(_pe_dropout_kernel,
                         rows_per_batch=n_tiles * tile_rows,
                         tile_rows=tile_rows)
        grid_spec = pltpu.PrefetchScalarGridSpec(
            num_scalar_prefetch=1,
            # Row tile outer, batch inner -> PE block index constant across
            # the inner axis, so the batch-invariant PE tile is fetched once
            # per row tile and reused over all batches.
            grid=(n_tiles, B),
            in_specs=[
                pl.BlockSpec((None, tile_rows, C), lambda t, b, seed: (b, t, 0)),  # x
                pl.BlockSpec((tile_rows, C), lambda t, b, seed: (t, 0)),           # pe
            ],
            out_specs=pl.BlockSpec((None, tile_rows, C), lambda t, b, seed: (b, t, 0)),
        )
        out2 = pl.pallas_call(
            kernel, out_shape=out_shape, grid_spec=grid_spec,
            compiler_params=cparams,
        )(seed_arr, x2, pe2)
    else:
        grid_spec = pltpu.PrefetchScalarGridSpec(
            num_scalar_prefetch=0,
            grid=(n_tiles, B),
            in_specs=[
                pl.BlockSpec((None, tile_rows, C), lambda t, b: (b, t, 0)),  # x
                pl.BlockSpec((tile_rows, C), lambda t, b: (t, 0)),           # pe
            ],
            out_specs=pl.BlockSpec((None, tile_rows, C), lambda t, b: (b, t, 0)),
        )
        out2 = pl.pallas_call(
            _pe_add_kernel, out_shape=out_shape, grid_spec=grid_spec,
            compiler_params=cparams,
        )(x2, pe2)

    out = out2.reshape(B, S, Dp)
    if Dp != D:
        out = out[:, :, :D]
    return out


if __name__ == "__main__":
    # Small shapes consistent with the module's forward: (batch, seq, embed_dim)
    B, S, D = 2, 8, 32
    MAX_LEN = 64

    key = jax.random.PRNGKey(0)
    x = jax.random.normal(key, (B, S, D), dtype=jnp.float32)
    pe_table = _build_pe_table(embed_dim=D, max_len=MAX_LEN)

    # Training path (PE add + dropout p=0.1, survivors scaled by 1/0.9).
    out = jax.block_until_ready(
        positional_encoding_forward(x, pe_table, seed=0, training=True))
    assert out.shape == (B, S, D) and out.dtype == jnp.float32

    ref = x + pe_table[None, :S, :]
    # Every non-dropped element must equal (x + pe) / (1 - p).
    err = jnp.where(out == 0.0, 0.0, jnp.abs(out - ref * KEEP_SCALE))
    assert float(jnp.max(err)) < 1e-5
    drop_frac = float(jnp.mean((out == 0.0).astype(jnp.float32)))
    assert 0.0 < drop_frac < 0.3, drop_frac

    # Eval path (dropout is a no-op) must match the plain PE add.
    out_eval = jax.block_until_ready(
        positional_encoding_forward(x, pe_table, training=False))
    assert jnp.allclose(out_eval, ref, atol=1e-6)

    print("KERNEL_OK")
</pallas_src>

<mosaic_0001>
module attributes {stable_mosaic.version = 11 : i64} {
  func.func @_pe_dropout_kernel(%arg0: i32, %arg1: i32, %arg2: memref<1xi32, #tpu.memory_space<smem>>, %arg3: memref<1x2x128xf32, #tpu.memory_space<vmem>>, %arg4: memref<2x128xf32, #tpu.memory_space<vmem>>, %arg5: memref<1x2x128xf32, #tpu.memory_space<vmem>>) attributes {dimension_semantics = [#tpu.dimension_semantics<parallel>, #tpu.dimension_semantics<parallel>], iteration_bounds = array<i64: 1, 2>, scalar_prefetch = 1 : i64, scratch_operands = 0 : i64, tpu.core_type = #tpu.core_type<tc>, window_params = [{transform_indices = @transform_0, window_bounds = array<i64: 1, 2, 128>}, {transform_indices = @transform_1, window_bounds = array<i64: 2, 128>}, {transform_indices = @transform_2, window_bounds = array<i64: 1, 2, 128>}]} {
    %c0 = arith.constant 0 : index
    %c0_0 = arith.constant 0 : index
    %c0_1 = arith.constant 0 : index
    %0 = vector.load %arg3[%c0, %c0_0, %c0_1] : memref<1x2x128xf32, #tpu.memory_space<vmem>>, vector<1x2x128xf32>
    %1 = vector.shape_cast %0 : vector<1x2x128xf32> to vector<2x128xf32>
    %c0_2 = arith.constant 0 : index
    %c0_3 = arith.constant 0 : index
    %2 = vector.load %arg4[%c0_2, %c0_3] : memref<2x128xf32, #tpu.memory_space<vmem>>, vector<2x128xf32>
    %3 = arith.addf %1, %2 : vector<2x128xf32>
    %4 = tpu.iota {dimensions = array<i32: 0>} : vector<2x128xi32>
    %5 = tpu.iota {dimensions = array<i32: 1>} : vector<2x128xi32>
    %c2_i32 = arith.constant 2 : i32
    %6 = arith.muli %arg1, %c2_i32 : i32
    %c2_i32_4 = arith.constant 2 : i32
    %7 = arith.muli %arg0, %c2_i32_4 : i32
    %8 = arith.addi %6, %7 : i32
    %9 = vector.broadcast %8 : i32 to vector<2x128xi32>
    %10 = arith.addi %4, %9 : vector<2x128xi32>
    %c7_i32 = arith.constant 7 : i32
    %11 = vector.broadcast %c7_i32 : i32 to vector<2x128xi32>
    %12 = arith.shli %10, %11 : vector<2x128xi32>
    %13 = arith.ori %12, %5 : vector<2x128xi32>
    %c0_5 = arith.constant 0 : index
    %14 = memref.load %arg2[%c0_5] : memref<1xi32, #tpu.memory_space<smem>>
    %c-1640531527_i32 = arith.constant -1640531527 : i32
    %15 = arith.muli %14, %c-1640531527_i32 : i32
    %16 = vector.broadcast %15 : i32 to vector<2x128xi32>
    %17 = arith.xori %13, %16 : vector<2x128xi32>
    %c16_i32 = arith.constant 16 : i32
    %18 = vector.broadcast %c16_i32 : i32 to vector<2x128xi32>
    %19 = arith.shrui %17, %18 : vector<2x128xi32>
    %20 = arith.xori %17, %19 : vector<2x128xi32>
    %c-2048144789_i32 = arith.constant -2048144789 : i32
    %21 = vector.broadcast %c-2048144789_i32 : i32 to vector<2x128xi32>
    %22 = arith.muli %20, %21 : vector<2x128xi32>
    %c13_i32 = arith.constant 13 : i32
    %23 = vector.broadcast %c13_i32 : i32 to vector<2x128xi32>
    %24 = arith.shrui %22, %23 : vector<2x128xi32>
    %25 = arith.xori %22, %24 : vector<2x128xi32>
    %c-1028477387_i32 = arith.constant -1028477387 : i32
    %26 = vector.broadcast %c-1028477387_i32 : i32 to vector<2x128xi32>
    %27 = arith.muli %25, %26 : vector<2x128xi32>
    %c16_i32_6 = arith.constant 16 : i32
    %28 = vector.broadcast %c16_i32_6 : i32 to vector<2x128xi32>
    %29 = arith.shrui %27, %28 : vector<2x128xi32>
    %30 = arith.xori %27, %29 : vector<2x128xi32>
    %c8_i32 = arith.constant 8 : i32
    %31 = vector.broadcast %c8_i32 : i32 to vector<2x128xi32>
    %32 = arith.shrui %30, %31 : vector<2x128xi32>
    %c1677722_i32 = arith.constant 1677722 : i32
    %33 = vector.broadcast %c1677722_i32 : i32 to vector<2x128xi32>
    %34 = arith.cmpi sge, %32, %33 : vector<2x128xi32>
    %cst = arith.constant 1.11111116 : f32
    %35 = vector.broadcast %cst : f32 to vector<2x128xf32>
    %36 = arith.mulf %3, %35 : vector<2x128xf32>
    %cst_7 = arith.constant 0.000000e+00 : f32
    %37 = vector.broadcast %cst_7 : f32 to vector<2x128xf32>
    %38 = arith.select %34, %36, %37 : vector<2x128xi1>, vector<2x128xf32>
    %c0_8 = arith.constant 0 : index
    %c0_9 = arith.constant 0 : index
    %c0_10 = arith.constant 0 : index
    %39 = vector.load %arg5[%c0_8, %c0_9, %c0_10] : memref<1x2x128xf32, #tpu.memory_space<vmem>>, vector<1x2x128xf32>
    %40 = vector.shape_cast %39 : vector<1x2x128xf32> to vector<2x128xf32>
    %41 = vector.shape_cast %38 : vector<2x128xf32> to vector<1x2x128xf32>
    tpu.vector_store %arg5[%c0_8, %c0_9, %c0_10], %41 {strides = array<i32>} : memref<1x2x128xf32, #tpu.memory_space<vmem>>, vector<1x2x128xf32>,
    return
  }
  func.func @transform_0(%arg0: i32, %arg1: i32, %arg2: memref<1xi32, #tpu.memory_space<smem>>) -> (i32, i32, i32) {
    %c0_i32 = arith.constant 0 : i32
    %c0_i32_0 = arith.constant 0 : i32
    return %arg1, %arg0, %c0_i32 : i32, i32, i32
  }
  func.func @transform_1(%arg0: i32, %arg1: i32, %arg2: memref<1xi32, #tpu.memory_space<smem>>) -> (i32, i32) {
    %c0_i32 = arith.constant 0 : i32
    %c0_i32_0 = arith.constant 0 : i32
    return %arg0, %c0_i32 : i32, i32
  }
  func.func @transform_2(%arg0: i32, %arg1: i32, %arg2: memref<1xi32, #tpu.memory_space<smem>>) -> (i32, i32, i32) {
    %c0_i32 = arith.constant 0 : i32
    %c0_i32_0 = arith.constant 0 : i32
    return %arg1, %arg0, %c0_i32 : i32, i32, i32
  }
}

</mosaic_0001>

<llo_original>
// kernel: tpu_custom_call.1
$region0: #{tpu_custom_call.1}
  #allocation0 [shape = 'u32[]', space=smem, size = 0x4, offset = 0x4, fixed_abs, tag = 'smem constant byte address 0x4 - core index']
  #allocation1 [shape = 'u32[144,128]{1,0:T(1,128)}', space=vmem, size = 0x12000, scoped, tag = 'internal scratch']
  #allocation2 [shape = 's32[1]{0}', space=sflag, size = 0x4, scoped, tag = 'scoped memory for tpu_custom_call.1']
  #allocation3 [shape = 's32[1]{0:T(128)S(6)}', space=smem, size = 0x200, scoped, tag = 'prefetched SMEM operand 0']
  %s0 = inlined_call_operand.<no memory space> [shape: s32[1], index: 0, kind: input, shape index: {}]
  %s1 = inlined_call_operand.hbm [shape: f32[2,2,128], index: 1, kind: input, shape index: {}]
  %s2 = inlined_call_operand.vmem [shape: f32[2,128], index: 2, kind: input, shape index: {}]
  %s3 = inlined_call_operand.hbm [shape: f32[2,2,128], index: 3, kind: output, shape index: {}]
  %s4 = sld [smem:[#allocation0]]
  $region45: #{tpu_custom_call.1} parent=0
    _
  %s6 = ssub.s32 1, %s4
  %s7 = scalar_select 0, %s6, %s4
  %8 = sst [smem:[#allocation3]] %s0
  $region1: #{tpu_custom_call.1} parent=0
    #allocation4 [shape = 'u8[2048]{0}', space=vmem, size = 0x800, scoped, tag = 'input window, operand 1']
    #allocation5 [shape = 's32[2]{0}', space=sflag, size = 0x8, scoped, tag = 'scoped memory for tpu_custom_call.1']
    #allocation6 [shape = 's32[2]{0}', space=sflag, size = 0x8, scoped, tag = 'scoped memory for tpu_custom_call.1']
    #allocation7 [shape = 'u8[2048]{0}', space=vmem, size = 0x800, scoped, tag = 'output window, operand 0']
    %9 = vsyncpa [#allocation5], 0
    %s10 = scalar_lea.sflag [#allocation5], 1
    %11 = vsyncpa %s10, 0
    %12 = vsyncpa [#allocation6], 0
    %s13 = scalar_lea.sflag [#allocation6], 1
    %14 = vsyncpa %s13, 0
    loop: start=0, step=1, limit=4
    $region2: #{tpu_custom_call.1} parent=1 // loop_pre_header
      _
    $region3: #{tpu_custom_call.1} parent=1 // loop_header
      %s16 = sphi 0, %s20
      %p17 = scmp.ge.s32.totalorder %s16, 4
      %s23 = sphi 0, %s35
      %s24 = sphi 0, %s31
      %s25 = sphi 0, %s23
      %s26 = sphi 0, %s24
      %s27 = sphi 0, %s25
      %s28 = sphi 0, %s26
      %s40 = sphi 0, %s42
      %s43 = sphi 0, %s40
      %s44 = sphi 0, %s43
      %s60 = sphi 0, %s44
      %s66 = sphi 0, %s68
      %s69 = sphi 0, %s66
      %s70 = sphi 0, %s69
      %s86 = sphi 0, %s70
      %s94 = sphi 0, %s96
      %s97 = sphi 0, %s94
      %s98 = sphi 0, %s97
      %s114 = sphi 0, %s98
    $region4: #{tpu_custom_call.1} parent=1 // loop_header_branch
      %19 = sbr.rel (%p17) target = $region8
    $region5: #{tpu_custom_call.1} parent=1 // loop_body
      %s21 = ssub.s32 %s16, 1
      %s22 = ssub.s32 %s16, 2
      %s29 = sadd.s32 1, %s24
      %p30 = scmp.ge.s32.totalorder %s29, 2
      %s31 = scalar_select %p30, 0, %s29
      %s32 = sadd.s32 1, %s23
      %s33 = scalar_select %p30, %s32, %s23
      %p34 = scmp.ge.s32.totalorder %s33, 1
      %s35 = scalar_select %p34, 0, %s33
      %s36 = ssub.s32 %s24, %s31
      %s37 = ssub.s32 %s23, %s35
      %s38 = sor.u32 %s36, %s37
      %p39 = scmp.eq.s32.totalorder %s38, 0
      %s41 = sadd.s32 %s40, 1
      %s42 = scalar_select %p39, %s40, %s41
      %p45 = pneg %p39
      %p46 = scmp.eq.s32.totalorder %s16, 1
      %p47 = por %p45, %p46
      %p48 = scmp.ne.s32.totalorder %s40, %s43
      %p49 = scmp.eq.s32.totalorder %s16, 0
      %p50 = por %p48, %p49
      %p51 = scmp.ne.s32.totalorder %s40, %s43
      %p52 = scmp.eq.s32.totalorder %s21, 1
      %p53 = por %p51, %p52
      %p54 = scmp.ne.s32.totalorder %s43, %s44
      %p55 = scmp.eq.s32.totalorder %s21, 0
      %p56 = por %p54, %p55
      %p57 = scmp.ne.s32.totalorder %s43, %s44
      %p58 = scmp.eq.s32.totalorder %s22, 1
      %p59 = por %p57, %p58
      %p61 = scmp.ne.s32.totalorder %s44, %s60
      %p62 = scmp.eq.s32.totalorder %s22, 0
      %p63 = por %p61, %p62
      %s64 = ssub.s32 %s23, %s35
      %p65 = scmp.eq.s32.totalorder %s64, 0
      %s67 = sadd.s32 %s66, 1
      %s68 = scalar_select %p65, %s66, %s67
      %p71 = pneg %p65
      %p72 = scmp.eq.s32.totalorder %s16, 1
      %p73 = por %p71, %p72
      %p74 = scmp.ne.s32.totalorder %s66, %s69
      %p75 = scmp.eq.s32.totalorder %s16, 0
      %p76 = por %p74, %p75
      %p77 = scmp.ne.s32.totalorder %s66, %s69
      %p78 = scmp.eq.s32.totalorder %s21, 1
      %p79 = por %p77, %p78
      %p80 = scmp.ne.s32.totalorder %s69, %s70
      %p81 = scmp.eq.s32.totalorder %s21, 0
      %p82 = por %p80, %p81
      %p83 = scmp.ne.s32.totalorder %s69, %s70
      %p84 = scmp.eq.s32.totalorder %s22, 1
      %p85 = por %p83, %p84
      %p87 = scmp.ne.s32.totalorder %s70, %s86
      %p88 = scmp.eq.s32.totalorder %s22, 0
      %p89 = por %p87, %p88
      %s90 = ssub.s32 %s24, %s31
      %s91 = ssub.s32 %s23, %s35
      %s92 = sor.u32 %s90, %s91
      %p93 = scmp.eq.s32.totalorder %s92, 0
      %s95 = sadd.s32 %s94, 1
      %s96 = scalar_select %p93, %s94, %s95
      %p99 = pneg %p93
      %p100 = scmp.eq.s32.totalorder %s16, 1
      %p101 = por %p99, %p100
      %p102 = scmp.ne.s32.totalorder %s94, %s97
      %p103 = scmp.eq.s32.totalorder %s16, 0
      %p104 = por %p102, %p103
      %p105 = scmp.ne.s32.totalorder %s94, %s97
      %p106 = scmp.eq.s32.totalorder %s21, 1
      %p107 = por %p105, %p106
      %p108 = scmp.ne.s32.totalorder %s97, %s98
      %p109 = scmp.eq.s32.totalorder %s21, 0
      %p110 = por %p108, %p109
      %p111 = scmp.ne.s32.totalorder %s97, %s98
      %p112 = scmp.eq.s32.totalorder %s22, 1
      %p113 = por %p111, %p112
      %p115 = scmp.ne.s32.totalorder %s98, %s114
      %p116 = scmp.eq.s32.totalorder %s22, 0
      %p117 = por %p115, %p116
      %p118 = scmp.le.s32.totalorder 1, %s16
      %p119 = scmp.lt.s32.totalorder %s16, 3
      %p120 = pnand %p118, %p119
      %p121 = pneg %p120
      // Predicated region
      $region9: #{tpu_custom_call.1} parent=5 // pred_check
        _
      $region10: #{tpu_custom_call.1} parent=5 // pred_check_branch
        %123 = sbr.rel (%p120) target = $region12
      $region11: #{tpu_custom_call.1} parent=5 // pred_region
        %s124 = ssub.s32 %s16, 1
        // Predicated region
        $region13: #{tpu_custom_call.1} parent=11 // pred_check
          %p125 = pneg %p82
        $region14: #{tpu_custom_call.1} parent=11 // pred_check_branch
          %127 = sbr.rel (%p125) target = $region16
        $region15: #{tpu_custom_call.1} parent=11 // pred_region
          %p128 = scmp.lt.s32.totalorder %s25, 0
          %s129 = scalar_select %p128, %s25, 0
          %s130 = smul.addr %s129, 2
          %s131 = scalar_lea.vmem %s2, %s130
        $region16: #{tpu_custom_call.1} parent=11 // pred_fallthru
          _
      $region12: #{tpu_custom_call.1} parent=5 // pred_fallthru
        _
      %p132 = scmp.lt.s32.totalorder %s16, 2
      // Predicated region
      $region17: #{tpu_custom_call.1} parent=5 // pred_check
        %p133 = pneg %p132
      $region18: #{tpu_custom_call.1} parent=5 // pred_check_branch
        %135 = sbr.rel (%p133) target = $region20
      $region19: #{tpu_custom_call.1} parent=5 // pred_region
        // Predicated region
        $region21: #{tpu_custom_call.1} parent=19 // pred_check
          %p136 = pneg %p50
        $region22: #{tpu_custom_call.1} parent=19 // pred_check_branch
          %138 = sbr.rel (%p136) target = $region24
        $region23: #{tpu_custom_call.1} parent=19 // pred_region
          %s139 = sand.u32 %s40, 1
          %s140 = scalar_lea.sflag [#allocation5], %s139
          %s141 = sand.u32 %s40, 1
          %s142 = smul.addr %s141, 2
          %s143 = scalar_lea.vmem [#allocation4], %s142
          %s145 = ssub.s32 32, 32
          %146 = vsyncadd %s140, %s145
          %s147 = sadd.s32 %s23, %s24
          %s148 = smul.addr %s147, 32
          %s149 = scalar_lea.hbm %s1, %s148
          %s151 = sshll.u32 %s143, 4
          %s152 = int_to_ptr.vmem [resolvable:$true] %s151
          %154 = dma.hbm_to_vmem [thread:$0]  %s149, 32, %s152, %s140
        $region24: #{tpu_custom_call.1} parent=19 // pred_fallthru
          _
      $region20: #{tpu_custom_call.1} parent=5 // pred_fallthru
        _
      %p155 = scmp.le.s32.totalorder 1, %s16
      %p156 = scmp.lt.s32.totalorder %s16, 3
      %p157 = pnand %p155, %p156
      %p158 = pneg %p157
      // Predicated region
      $region25: #{tpu_custom_call.1} parent=5 // pred_check
        _
      $region26: #{tpu_custom_call.1} parent=5 // pred_check_branch
        %160 = sbr.rel (%p157) target = $region28
      $region27: #{tpu_custom_call.1} parent=5 // pred_region
        %s161 = ssub.s32 %s16, 1
        %s162 = sand.u32 %s43, 1
        %s163 = scalar_lea.sflag [#allocation5], %s162
        %s164 = sand.u32 %s43, 1
        %s165 = smul.addr %s164, 2
        %s166 = scalar_lea.vmem [#allocation4], %s165
        // Predicated region
        $region29: #{tpu_custom_call.1} parent=27 // pred_check
          %p167 = pneg %p56
        $region30: #{tpu_custom_call.1} parent=27 // pred_check_branch
          %169 = sbr.rel (%p167) target = $region32
        $region31: #{tpu_custom_call.1} parent=27 // pred_region
          %170 = dma.done %s163, 32
        $region32: #{tpu_custom_call.1} parent=27 // pred_fallthru
          _
        %s171 = sand.u32 %s43, 1
        %s172 = scalar_lea.sflag [#allocation5], %s171
        %s173 = sand.u32 %s43, 1
        %s174 = smul.addr %s173, 2
        %s175 = scalar_lea.vmem [#allocation4], %s174
        %p176 = pneg %p56
        %p177 = pneg %p53
        %p178 = scmp.lt.s32.totalorder %s25, 0
        %s179 = scalar_select %p178, %s25, 0
        %s180 = smul.addr %s179, 2
        %s181 = scalar_lea.vmem %s2, %s180
        %p182 = pneg %p82
        %p183 = pneg %p79
        %p184 = pneg %p110
        %p185 = pneg %p107
        %s186 = sand.u32 %s97, 1
        %s187 = scalar_lea.sflag [#allocation6], %s186
        %s188 = sand.u32 %s97, 1
        %s189 = smul.addr %s188, 2
        %s190 = scalar_lea.vmem [#allocation7], %s189
        %p191 = scmp.lt.s32.totalorder %s25, 0
        %s192 = scalar_select %p191, %s25, 0
        %s193 = smul.addr %s192, 2
        %s194 = scalar_lea.vmem %s2, %s193
        %v195 = vld [vmem:[%s166] sm:$0x3]
        %v196 = vld [vmem:[%s194] sm:$0x3]
        %v197 = vadd.f32 %v195, %v196
        %v198 = vlaneseq
        %v199 = vshrl.u32 %v198, 7
        %v200 = vlaneseq
        %v201 = vand.u32 %v200, 127
        %s202 = smul.u32 %s26, 2
        %s203 = smul.u32 %s25, 2
        %s204 = sadd.s32 %s202, %s203
        %v205 = vstv %s204
        %v206 = vadd.s32 %v199, %v205
        %v207 = vshll.u32 %v206, 7
        %v208 = vor.u32 %v207, %v201
        %s209 = sld [smem:[#allocation3]]
        %s210 = smul.u32 %s209, 2654435769
        %v211 = vstv %s210
        %v212 = vxor.u32 %v208, %v211
        %v213 = vshrl.u32 %v212, 16
        %v214 = vxor.u32 %v212, %v213
        %v215 = vmul.u32 %v214, 2246822507
        %v216 = vshrl.u32 %v215, 13
        %v217 = vxor.u32 %v215, %v216
        %v218 = vmul.u32 %v217, 3266489909
        %v219 = vshrl.u32 %v218, 16
        %v220 = vxor.u32 %v218, %v219
        %v221 = vshrl.u32 %v220, 8
        %vm222 = vcmp.ge.s32.totalorder %v221, 1677722
        %v223 = vmul.f32 %v197, 1.1111112
        %v224 = vsel %vm222, %v223, 0.0
        %225 = vst [vmem:[%s190] sm:$0x3] %v224
        %s226 = sand.u32 %s97, 1
        %s227 = scalar_lea.sflag [#allocation6], %s226
        %s228 = sand.u32 %s97, 1
        %s229 = smul.addr %s228, 2
        %s230 = scalar_lea.vmem [#allocation7], %s229
        // Predicated region
        $region33: #{tpu_custom_call.1} parent=27 // pred_check
          %p231 = pneg %p107
        $region34: #{tpu_custom_call.1} parent=27 // pred_check_branch
          %233 = sbr.rel (%p231) target = $region36
        $region35: #{tpu_custom_call.1} parent=27 // pred_region
          %s235 = ssub.s32 32, 32
          %236 = vsyncadd %s227, %s235
          %s237 = sadd.s32 %s25, %s26
          %s238 = smul.addr %s237, 32
          %s239 = scalar_lea.hbm %s3, %s238
          %s241 = sshll.u32 %s230, 4
          %s242 = int_to_ptr.vmem [resolvable:$true] %s241
          %244 = dma.vmem_to_hbm [thread:$0]  %s242, 32, %s239, %s227
        $region36: #{tpu_custom_call.1} parent=27 // pred_fallthru
          _
      $region28: #{tpu_custom_call.1} parent=5 // pred_fallthru
        _
      %p245 = scmp.le.s32.totalorder 2, %s16
      // Predicated region
      $region37: #{tpu_custom_call.1} parent=5 // pred_check
        %p246 = pneg %p245
      $region38: #{tpu_custom_call.1} parent=5 // pred_check_branch
        %248 = sbr.rel (%p246) target = $region40
      $region39: #{tpu_custom_call.1} parent=5 // pred_region
        %s249 = ssub.s32 %s16, 2
        // Predicated region
        $region41: #{tpu_custom_call.1} parent=39 // pred_check
          %p250 = pneg %p113
        $region42: #{tpu_custom_call.1} parent=39 // pred_check_branch
          %252 = sbr.rel (%p250) target = $region44
        $region43: #{tpu_custom_call.1} parent=39 // pred_region
          %s253 = sand.u32 %s98, 1
          %s254 = scalar_lea.sflag [#allocation6], %s253
          %s255 = sand.u32 %s98, 1
          %s256 = smul.addr %s255, 2
          %s257 = scalar_lea.vmem [#allocation7], %s256
          %258 = dma.done %s254, 32
        $region44: #{tpu_custom_call.1} parent=39 // pred_fallthru
          _
      $region40: #{tpu_custom_call.1} parent=5 // pred_fallthru
        _
    $region6: #{tpu_custom_call.1} parent=1 // loop_footer
      %s20 = sadd.s32 1, %s16
    $region7: #{tpu_custom_call.1} parent=1 // loop_footer_branch
      %15 = sbr.rel target = $region3
    $region8: #{tpu_custom_call.1} parent=1 // loop_exit
      _
    %259 = vsyncpa [#allocation5], 1
    %s260 = scalar_lea.sflag [#allocation5], 1
    %261 = vsyncpa %s260, 1
    %262 = vsyncpa [#allocation6], 1
    %s263 = scalar_lea.sflag [#allocation6], 1
    %264 = vsyncpa %s263, 1

</llo_original>
